<compile_context>
chip_gen: v6e
topology: v6e:2x2x1
jax: 0.10.0
libtpu: 0.0.40
codegen_flags: <defaults>
</compile_context>

<pallas_src>
import functools
import math

import jax
import jax.numpy as jnp
from jax.experimental import pallas as pl
from jax.experimental.pallas import tpu as pltpu

LANES = 128           # lane axis (last dim of every tile)
MAX_TILE_ROWS = 8192  # (8192, 128) f32 tile = 4 MiB per input buffer
ROW_ALIGN = 64        # multiple of the int8 sublane tile (32) and of ACC_ROWS
ACC_ROWS = 64         # accumulator block: 64 x 128 f32 = 32 KiB (8 vregs)


def _round_up(x: int, m: int) -> int:
    return (x + m - 1) // m * m


def _next_pow2(x: int) -> int:
    return 1 << max(0, (x - 1).bit_length())


@functools.lru_cache(maxsize=1)
def _n_split_for_device() -> int:
    """2-way outer 'parallel' split only on chips with 2 TensorCores/megacore."""
    try:
        kind = jax.devices()[0].device_kind.lower()
    except Exception:
        return 1
    return 2 if any(tag in kind for tag in ("v7", "v4", "v5p")) else 1


def _plan_tiling(rows: int, n_split: int, bucket: bool):
    """Choose (padded_rows, tile_rows, steps); all divisibilities hold by construction."""
    if bucket:
        # Power-of-two bucketing -> one compiled kernel per bucket, not per E.
        padded_rows = max(ROW_ALIGN * n_split, _next_pow2(rows))
    else:
        padded_rows = _round_up(rows, ROW_ALIGN * n_split)
    per_core = padded_rows // n_split
    if per_core <= MAX_TILE_ROWS:
        tile_rows, steps = per_core, 1
    else:
        tile_rows = MAX_TILE_ROWS
        if not bucket:
            padded_rows = _round_up(rows, tile_rows * n_split)
        steps = padded_rows // (tile_rows * n_split)
    return padded_rows, tile_rows, steps


def _int_pow(x, n: int):
    """x**n for integer n >= 1 by squaring (VPU multiplies only, no EUP)."""
    acc, base = None, x
    while n > 0:
        if n & 1:
            acc = base if acc is None else acc * base
        n >>= 1
        if n:
            base = base * base
    return acc


def _focal_sum_kernel(*refs, alpha: float, gamma: float, has_pw: bool):
    if has_pw:
        w_ref, t_ref, pwt_ref, acc_ref = refs
    else:
        w_ref, t_ref, acc_ref = refs
        pwt_ref = None

    @pl.when(pl.program_id(1) == 0)
    def _():
        acc_ref[...] = jnp.zeros_like(acc_ref)

    w = w_ref[...]                                        # f32 probabilities in (0,1)
    t = t_ref[...].astype(jnp.float32)                    # int8 {0,1} -> f32
    pwt = pwt_ref[...].astype(jnp.float32) if has_pw else t   # pos_weight * target

    probs_neg = 1.0 - w
    log_pos = jnp.log(w)
    log_neg = jnp.log(probs_neg)

    if gamma == 0.0:
        pow_pos = jnp.ones_like(w)
        pow_neg = jnp.ones_like(w)
    elif gamma == int(gamma) and 1 <= int(gamma) <= 8:
        pow_pos = _int_pow(w, int(gamma))                 # VPU multiply chain
        pow_neg = _int_pow(probs_neg, int(gamma))
    else:
        pow_pos = jnp.exp(gamma * log_pos)                # general gamma: reuse the logs
        pow_neg = jnp.exp(gamma * log_neg)

    loss = ((-alpha) * pwt * pow_neg * log_pos
            + (alpha - 1.0) * (1.0 - t) * pow_pos * log_neg)

    rows = loss.shape[0]
    if rows != ACC_ROWS:
        # Fold the tile to (ACC_ROWS, 128) with plain vector adds (8 independent
        # add chains).  No cross-lane work; the tiny final reduce is on the host.
        loss = jnp.sum(loss.reshape(rows // ACC_ROWS, ACC_ROWS, LANES), axis=0)
    acc_ref[...] += loss


def binary_focal_loss_pallas(*, inpt, target, alpha=0.25, gamma=2.0,
                             pos_weight=None, pos_weight_is_binary=False,
                             bucket=True):
    """Pallas implementation of `_binary_focal_loss` (mean over all edges).

    `pos_weight=None` follows the torch default (pos_weight == 1); then
    pos_weight * target == target and the third HBM stream is dropped.
    Set `pos_weight_is_binary=True` when pos_weight only takes values {0, 1}
    (the HaughtyFocalLoss case) so it streams as int8; otherwise it streams f32.
    """
    assert gamma >= 0.0
    assert 0.0 <= alpha <= 1.0
    e = int(inpt.shape[0])
    n_split = _n_split_for_device()

    w = inpt.astype(jnp.float32)
    t = target.astype(jnp.int8)              # single cast from bool/int/float {0,1}

    has_pw = pos_weight is not None
    if has_pw:
        if pos_weight_is_binary:
            pwt = pos_weight.astype(jnp.int8) * t                      # exact {0,1}
        else:
            pwt = pos_weight.astype(jnp.float32) * t.astype(jnp.float32)

    rows = -(-e // LANES)
    padded_rows, tile_rows, steps = _plan_tiling(rows, n_split, bucket)
    padded_e = padded_rows * LANES
    n_pad = padded_e - e

    def _prep(x, pad_value):
        if n_pad:
            x = jnp.pad(x, (0, n_pad), constant_values=pad_value)
        return x.reshape(padded_rows, LANES)

    inputs = [_prep(w, 0.5),                 # 0.5 keeps both logs finite in the padding
              _prep(t, 0)]
    if has_pw:
        inputs.append(_prep(pwt, 0))

    kernel = functools.partial(_focal_sum_kernel, alpha=float(alpha),
                               gamma=float(gamma), has_pw=has_pw)

    bytes_per_elem = 4 + 1 + (0 if not has_pw else (1 if pos_weight_is_binary else 4))
    general_gamma = not (float(gamma).is_integer() and 0 <= int(gamma) <= 8)
    out_rows = n_split * ACC_ROWS
    cost = pl.CostEstimate(
        flops=14 * padded_e,
        transcendentals=(4 if general_gamma else 2) * padded_e,
        bytes_accessed=bytes_per_elem * padded_e + 4 * out_rows * LANES,
    )

    tile_spec = pl.BlockSpec((tile_rows, LANES), lambda i, j: (i * steps + j, 0))

    partials = pl.pallas_call(
        kernel,
        out_shape=jax.ShapeDtypeStruct((out_rows, LANES), jnp.float32),
        grid_spec=pltpu.PrefetchScalarGridSpec(
            num_scalar_prefetch=0,
            grid=(n_split, steps),
            in_specs=[tile_spec] * len(inputs),
            # Output block index is constant along j -> stays resident in VMEM
            # and acts as the per-core accumulator (written back once per i).
            out_specs=pl.BlockSpec((ACC_ROWS, LANES), lambda i, j: (i, 0)),
        ),
        compiler_params=pltpu.CompilerParams(
            dimension_semantics=("parallel", "arbitrary"),
            vmem_limit_bytes=32 * 1024 * 1024,
        ),
        cost_estimate=cost,
    )(*inputs)

    total = jnp.sum(partials)
    if n_pad:
        # Each padded element (w=0.5, t=0, pwt=0) contributes exactly
        # (alpha-1) * 0.5**gamma * ln(0.5); subtract it instead of masking in-kernel.
        total = total - n_pad * (alpha - 1.0) * (0.5 ** gamma) * math.log(0.5)
    return total / e


def falsify_low_pt_edges(*, y, edge_index=None, pt=None, pt_thld=0.0):
    """Plain-JAX glue: optional pt-threshold falsification (data-dependent gather)."""
    if math.isclose(pt_thld, 0.0):
        return y
    assert edge_index is not None
    assert pt is not None
    return y.astype(bool) & (pt[edge_index[0, :]] > pt_thld)


class HaughtyFocalLoss:
    """JAX/Pallas port of gnn_tracking HaughtyFocalLoss (no trainable params)."""

    def __init__(self, *, alpha: float = 0.25, gamma: float = 2.0, pt_thld: float = 0.0):
        self._alpha = alpha
        self._gamma = gamma
        self._pt_thld = pt_thld

    def __call__(self, *, w, y, edge_index, pt, **kwargs):
        # y is binary; the single int8 cast happens inside binary_focal_loss_pallas
        # (mirrors torch's y.long() without extra int32->f32->bf16 passes).
        if math.isclose(self._pt_thld, 0.0):
            # pos_weight == y == target, so pos_weight * target == target:
            # drop the third HBM stream entirely.
            return binary_focal_loss_pallas(
                inpt=w, target=y, alpha=self._alpha, gamma=self._gamma,
                pos_weight=None)
        pos_weight = falsify_low_pt_edges(
            y=y, edge_index=edge_index, pt=pt, pt_thld=self._pt_thld)
        return binary_focal_loss_pallas(
            inpt=w, target=y, alpha=self._alpha, gamma=self._gamma,
            pos_weight=pos_weight, pos_weight_is_binary=True)


def _reference_loss(w, y, edge_index, pt, alpha, gamma, pt_thld):
    """Pure-jnp reference mirroring the PyTorch code, for a sanity check."""
    if math.isclose(pt_thld, 0.0):
        pw = y.astype(jnp.float32)
    else:
        pw = (y.astype(bool) & (pt[edge_index[0, :]] > pt_thld)).astype(jnp.float32)
    t = y.astype(jnp.float32)
    pos = -alpha * pw * (1.0 - w) ** gamma * t * jnp.log(w)
    neg = -(1.0 - alpha) * w ** gamma * (1.0 - t) * jnp.log(1.0 - w)
    return jnp.mean(pos + neg)


if __name__ == "__main__":
    key = jax.random.PRNGKey(0)
    k1, k2, k3, k4 = jax.random.split(key, 4)

    E = 2048        # number of edges
    N_HITS = 512    # number of hits

    # edge "probabilities" in (0,1)
    w = jax.nn.sigmoid(jax.random.normal(k1, (E,), dtype=jnp.float32))
    # ground-truth edge labels {0,1}
    y = (jax.random.uniform(k2, (E,)) > 0.7).astype(jnp.float32)
    # edge index (2, E) into hits
    edge_index = jax.random.randint(k3, (2, E), 0, N_HITS, dtype=jnp.int32)
    # hit pt
    pt = jax.random.uniform(k4, (N_HITS,), dtype=jnp.float32) * 3.0

    # default hyperparameters (pt_thld=0.0 -> 2-stream kernel) and a thresholded run
    for pt_thld in (0.0, 0.9):
        loss_mod = HaughtyFocalLoss(alpha=0.25, gamma=2.0, pt_thld=pt_thld)
        loss = jax.block_until_ready(loss_mod(w=w, y=y, edge_index=edge_index, pt=pt))
        ref = _reference_loss(w, y, edge_index, pt, 0.25, 2.0, pt_thld)
        assert jnp.allclose(loss, ref, rtol=2e-4, atol=1e-5), (pt_thld, loss, ref)

    # ragged edge count (not a multiple of 128) + integer-power gamma=3 path
    E2 = 1000
    w2, y2, ei2 = w[:E2], y[:E2], edge_index[:, :E2]
    loss_mod = HaughtyFocalLoss(alpha=0.25, gamma=3.0, pt_thld=0.9)
    loss = jax.block_until_ready(loss_mod(w=w2, y=y2, edge_index=ei2, pt=pt))
    ref = _reference_loss(w2, y2, ei2, pt, 0.25, 3.0, 0.9)
    assert jnp.allclose(loss, ref, rtol=2e-4, atol=1e-5), (loss, ref)

    # non-integer gamma exercises the exp(gamma*log(x)) EUP path
    loss_mod = HaughtyFocalLoss(alpha=0.25, gamma=1.5, pt_thld=0.0)
    loss = jax.block_until_ready(loss_mod(w=w2, y=y2, edge_index=ei2, pt=pt))
    ref = _reference_loss(w2, y2, ei2, pt, 0.25, 1.5, 0.0)
    assert jnp.allclose(loss, ref, rtol=2e-4, atol=1e-5), (loss, ref)

    print("KERNEL_OK")
</pallas_src>

<mosaic_0001>
module attributes {stable_mosaic.version = 11 : i64} {
  func.func @_focal_sum_kernel(%arg0: i32, %arg1: i32, %arg2: memref<64x128xf32, #tpu.memory_space<vmem>>, %arg3: memref<64x128xi8, #tpu.memory_space<vmem>>, %arg4: memref<64x128xf32, #tpu.memory_space<vmem>>) attributes {dimension_semantics = [#tpu.dimension_semantics<parallel>, #tpu.dimension_semantics<arbitrary>], iteration_bounds = array<i64: 1, 1>, scalar_prefetch = 0 : i64, scratch_operands = 0 : i64, tpu.core_type = #tpu.core_type<tc>, window_params = [{transform_indices = @transform_0, window_bounds = array<i64: 64, 128>}, {transform_indices = @transform_1, window_bounds = array<i64: 64, 128>}, {transform_indices = @transform_2, window_bounds = array<i64: 64, 128>}]} {
    %c0_i32 = arith.constant 0 : i32
    %0 = arith.cmpi eq, %arg1, %c0_i32 : i32
    %1 = arith.extui %0 : i1 to i32
    %c0_i32_0 = arith.constant 0 : i32
    %2 = arith.cmpi ne, %1, %c0_i32_0 : i32
    scf.if %2 {
      %cst_11 = arith.constant 0.000000e+00 : f32
      %26 = vector.broadcast %cst_11 : f32 to vector<64x128xf32>
      %c0_12 = arith.constant 0 : index
      %c0_13 = arith.constant 0 : index
      %27 = vector.load %arg4[%c0_12, %c0_13] : memref<64x128xf32, #tpu.memory_space<vmem>>, vector<64x128xf32>
      tpu.vector_store %arg4[%c0_12, %c0_13], %26 {strides = array<i32>} : memref<64x128xf32, #tpu.memory_space<vmem>>, vector<64x128xf32>,
    } else {
    }
    %c0 = arith.constant 0 : index
    %c0_1 = arith.constant 0 : index
    %3 = vector.load %arg2[%c0, %c0_1] : memref<64x128xf32, #tpu.memory_space<vmem>>, vector<64x128xf32>
    %c0_2 = arith.constant 0 : index
    %c0_3 = arith.constant 0 : index
    %4 = vector.load %arg3[%c0_2, %c0_3] : memref<64x128xi8, #tpu.memory_space<vmem>>, vector<64x128xi8>
    %5 = arith.sitofp %4 : vector<64x128xi8> to vector<64x128xf32>
    %cst = arith.constant 1.000000e+00 : f32
    %6 = vector.broadcast %cst : f32 to vector<64x128xf32>
    %7 = arith.subf %6, %3 : vector<64x128xf32>
    %8 = math.log %3 : vector<64x128xf32>
    %9 = math.log %7 : vector<64x128xf32>
    %10 = arith.mulf %3, %3 : vector<64x128xf32>
    %11 = arith.mulf %7, %7 : vector<64x128xf32>
    %cst_4 = arith.constant -2.500000e-01 : f32
    %12 = vector.broadcast %cst_4 : f32 to vector<64x128xf32>
    %13 = arith.mulf %12, %5 : vector<64x128xf32>
    %14 = arith.mulf %13, %11 : vector<64x128xf32>
    %15 = arith.mulf %14, %8 : vector<64x128xf32>
    %cst_5 = arith.constant 1.000000e+00 : f32
    %16 = vector.broadcast %cst_5 : f32 to vector<64x128xf32>
    %17 = arith.subf %16, %5 : vector<64x128xf32>
    %cst_6 = arith.constant -7.500000e-01 : f32
    %18 = vector.broadcast %cst_6 : f32 to vector<64x128xf32>
    %19 = arith.mulf %18, %17 : vector<64x128xf32>
    %20 = arith.mulf %19, %10 : vector<64x128xf32>
    %21 = arith.mulf %20, %9 : vector<64x128xf32>
    %22 = arith.addf %15, %21 : vector<64x128xf32>
    %c0_7 = arith.constant 0 : index
    %c0_8 = arith.constant 0 : index
    %23 = vector.load %arg4[%c0_7, %c0_8] : memref<64x128xf32, #tpu.memory_space<vmem>>, vector<64x128xf32>
    %24 = arith.addf %23, %22 : vector<64x128xf32>
    %c0_9 = arith.constant 0 : index
    %c0_10 = arith.constant 0 : index
    %25 = vector.load %arg4[%c0_9, %c0_10] : memref<64x128xf32, #tpu.memory_space<vmem>>, vector<64x128xf32>
    tpu.vector_store %arg4[%c0_9, %c0_10], %24 {strides = array<i32>} : memref<64x128xf32, #tpu.memory_space<vmem>>, vector<64x128xf32>,
    return
  }
  func.func @transform_0(%arg0: i32, %arg1: i32) -> (i32, i32) {
    %c1_i32 = arith.constant 1 : i32
    %0 = arith.muli %arg0, %c1_i32 : i32
    %1 = arith.addi %0, %arg1 : i32
    %c0_i32 = arith.constant 0 : i32
    %c0_i32_0 = arith.constant 0 : i32
    return %1, %c0_i32 : i32, i32
  }
  func.func @transform_1(%arg0: i32, %arg1: i32) -> (i32, i32) {
    %c1_i32 = arith.constant 1 : i32
    %0 = arith.muli %arg0, %c1_i32 : i32
    %1 = arith.addi %0, %arg1 : i32
    %c0_i32 = arith.constant 0 : i32
    %c0_i32_0 = arith.constant 0 : i32
    return %1, %c0_i32 : i32, i32
  }
  func.func @transform_2(%arg0: i32, %arg1: i32) -> (i32, i32) {
    %c0_i32 = arith.constant 0 : i32
    %c0_i32_0 = arith.constant 0 : i32
    return %arg0, %c0_i32 : i32, i32
  }
}

</mosaic_0001>

<llo_original>
// kernel: tpu_custom_call.1
$region0: #{tpu_custom_call.1}
  #allocation0 [shape = 'u32[]', space=smem, size = 0x4, offset = 0x4, fixed_abs, tag = 'smem constant byte address 0x4 - core index']
  #allocation1 [shape = 'u32[144,128]{1,0:T(1,128)}', space=vmem, size = 0x12000, scoped, tag = 'internal scratch']
  %s0 = inlined_call_operand.hbm [shape: f32[64,128], index: 0, kind: input, shape index: {}]
  %s1 = inlined_call_operand.hbm [shape: s8[64,128], index: 1, kind: input, shape index: {}]
  %s2 = inlined_call_operand.hbm [shape: f32[64,128], index: 2, kind: output, shape index: {}]
  %s3 = sld [smem:[#allocation0]]
  $region30: #{tpu_custom_call.1} parent=0
    _
  %s5 = ssub.s32 1, %s3
  %s6 = scalar_select 0, %s5, %s3
  $region1: #{tpu_custom_call.1} parent=0
    #allocation2 [shape = 'u8[32768]{0}', space=vmem, size = 0x8000, scoped, tag = 'input window, operand 0, single buffered']
    #allocation3 [shape = 's32[1]{0}', space=sflag, size = 0x4, scoped, tag = 'scoped memory for tpu_custom_call.1']
    #allocation4 [shape = 's32[1]{0}', space=sflag, size = 0x4, scoped, tag = 'scoped memory for tpu_custom_call.1']
    #allocation5 [shape = 'u8[8192]{0}', space=vmem, size = 0x2000, scoped, tag = 'input window, operand 1, single buffered']
    #allocation6 [shape = 's32[1]{0}', space=sflag, size = 0x4, scoped, tag = 'scoped memory for tpu_custom_call.1']
    #allocation7 [shape = 'u8[32768]{0}', space=vmem, size = 0x8000, scoped, tag = 'output window, operand 0, single buffered']
    %7 = vsyncpa [#allocation3], 0
    %8 = vsyncpa [#allocation6], 0
    %9 = vsyncpa [#allocation4], 0
    // Predicated region
    $region2: #{tpu_custom_call.1} parent=1 // pred_check
      _
    $region3: #{tpu_custom_call.1} parent=1 // pred_check_branch
      %11 = sbr.rel (0) target = $region5
    $region4: #{tpu_custom_call.1} parent=1 // pred_region
      %s12 = sadd.s32 0, 0
      %s13 = smul.u32 8, %s12
      %s15 = ssub.s32 1024, 1024
      %16 = vsyncadd [#allocation3], %s15
      %s17 = smul.addr %s13, 128
      %s18 = scalar_lea.hbm %s0, %s17
      %s19 = sshll.u32 [#allocation2], 4
      %s20 = int_to_ptr.vmem [resolvable:$true] %s19
      %25 = dma.hbm_to_vmem [thread:$0]  %s18, 1024, %s20, [#allocation3], 128, 128, 8
    $region5: #{tpu_custom_call.1} parent=1 // pred_fallthru
      _
    // Predicated region
    $region6: #{tpu_custom_call.1} parent=1 // pred_check
      _
    $region7: #{tpu_custom_call.1} parent=1 // pred_check_branch
      %27 = sbr.rel (0) target = $region9
    $region8: #{tpu_custom_call.1} parent=1 // pred_region
      %s28 = sadd.s32 0, 0
      %s29 = smul.u32 2, %s28
      %s31 = ssub.s32 256, 256
      %32 = vsyncadd [#allocation6], %s31
      %s33 = smul.addr %s29, 128
      %s34 = scalar_lea.hbm %s1, %s33
      %s35 = sshll.u32 [#allocation5], 4
      %s36 = int_to_ptr.vmem [resolvable:$true] %s35
      %41 = dma.hbm_to_vmem [thread:$0]  %s34, 256, %s36, [#allocation6], 128, 128, 8
    $region9: #{tpu_custom_call.1} parent=1 // pred_fallthru
      _
    // Predicated region
    $region10: #{tpu_custom_call.1} parent=1 // pred_check
      _
    $region11: #{tpu_custom_call.1} parent=1 // pred_check_branch
      %43 = sbr.rel (0) target = $region13
    $region12: #{tpu_custom_call.1} parent=1 // pred_region
      %44 = dma.done [#allocation3], 1024
    $region13: #{tpu_custom_call.1} parent=1 // pred_fallthru
      _
    // Predicated region
    $region14: #{tpu_custom_call.1} parent=1 // pred_check
      _
    $region15: #{tpu_custom_call.1} parent=1 // pred_check_branch
      %46 = sbr.rel (0) target = $region17
    $region16: #{tpu_custom_call.1} parent=1 // pred_region
      %47 = dma.done [#allocation6], 256
    $region17: #{tpu_custom_call.1} parent=1 // pred_fallthru
      _
    %s48 = sadd.s32 0, 0
    %s49 = smul.u32 8, %s48
    %s50 = sadd.s32 0, 0
    %s51 = smul.u32 2, %s50
    %p52 = scmp.eq.s32.totalorder 0, 0
    // Predicated region
    $region18: #{tpu_custom_call.1} parent=1 // pred_check
      %p53 = pneg %p52
    $region19: #{tpu_custom_call.1} parent=1 // pred_check_branch
      %55 = sbr.rel (%p53) target = $region21
    $region20: #{tpu_custom_call.1} parent=1 // pred_region
      %56 = vst [vmem:[#allocation7] sm:$0xff] 0.0
      %57 = vst [vmem:[#allocation7 + $0x8] sm:$0xff] 0.0
      %58 = vst [vmem:[#allocation7 + $0x10] sm:$0xff] 0.0
      %59 = vst [vmem:[#allocation7 + $0x18] sm:$0xff] 0.0
      %60 = vst [vmem:[#allocation7 + $0x20] sm:$0xff] 0.0
      %61 = vst [vmem:[#allocation7 + $0x28] sm:$0xff] 0.0
      %62 = vst [vmem:[#allocation7 + $0x30] sm:$0xff] 0.0
      %63 = vst [vmem:[#allocation7 + $0x38] sm:$0xff] 0.0
    $region21: #{tpu_custom_call.1} parent=1 // pred_fallthru
      _
    %v64 = vld [vmem:[#allocation2] sm:$0xff]
    %v65 = vld [vmem:[#allocation2 + $0x8] sm:$0xff]
    %v66 = vld [vmem:[#allocation2 + $0x10] sm:$0xff]
    %v67 = vld [vmem:[#allocation2 + $0x18] sm:$0xff]
    %v68 = vld [vmem:[#allocation2 + $0x20] sm:$0xff]
    %v69 = vld [vmem:[#allocation2 + $0x28] sm:$0xff]
    %v70 = vld [vmem:[#allocation2 + $0x30] sm:$0xff]
    %v71 = vld [vmem:[#allocation2 + $0x38] sm:$0xff]
    %v72 = vld [vmem:[#allocation5] sm:$0xff]
    %v73 = vld [vmem:[#allocation5 + $0x8] sm:$0xff]
    %v74 = vunpack.c.0.s8 %v72
    %v75 = vunpack.c.1.s8 %v72
    %v76 = vunpack.c.2.s8 %v72
    %v77 = vunpack.c.3.s8 %v72
    %v78 = vunpack.c.0.s8 %v73
    %v79 = vunpack.c.1.s8 %v73
    %v80 = vunpack.c.2.s8 %v73
    %v81 = vunpack.c.3.s8 %v73
    %v82 = vcvt.s32.f32 %v74
    %v83 = vcvt.s32.f32 %v75
    %v84 = vcvt.s32.f32 %v76
    %v85 = vcvt.s32.f32 %v77
    %v86 = vcvt.s32.f32 %v78
    %v87 = vcvt.s32.f32 %v79
    %v88 = vcvt.s32.f32 %v80
    %v89 = vcvt.s32.f32 %v81
    %v90 = vsub.f32 1.0, %v64
    %v91 = vsub.f32 1.0, %v65
    %v92 = vsub.f32 1.0, %v66
    %v93 = vsub.f32 1.0, %v67
    %v94 = vsub.f32 1.0, %v68
    %v95 = vsub.f32 1.0, %v69
    %v96 = vsub.f32 1.0, %v70
    %v97 = vsub.f32 1.0, %v71
    %v98 = vlog2.pop %v64
    %v99 = vmul.f32 %v98, 0.6931472
    %v100 = vlog2.pop %v65
    %v101 = vmul.f32 %v100, 0.6931472
    %v102 = vlog2.pop %v66
    %v103 = vmul.f32 %v102, 0.6931472
    %v104 = vlog2.pop %v67
    %v105 = vmul.f32 %v104, 0.6931472
    %v106 = vlog2.pop %v68
    %v107 = vmul.f32 %v106, 0.6931472
    %v108 = vlog2.pop %v69
    %v109 = vmul.f32 %v108, 0.6931472
    %v110 = vlog2.pop %v70
    %v111 = vmul.f32 %v110, 0.6931472
    %v112 = vlog2.pop %v71
    %v113 = vmul.f32 %v112, 0.6931472
    %v114 = vlog2.pop %v90
    %v115 = vmul.f32 %v114, 0.6931472
    %v116 = vlog2.pop %v91
    %v117 = vmul.f32 %v116, 0.6931472
    %v118 = vlog2.pop %v92
    %v119 = vmul.f32 %v118, 0.6931472
    %v120 = vlog2.pop %v93
    %v121 = vmul.f32 %v120, 0.6931472
    %v122 = vlog2.pop %v94
    %v123 = vmul.f32 %v122, 0.6931472
    %v124 = vlog2.pop %v95
    %v125 = vmul.f32 %v124, 0.6931472
    %v126 = vlog2.pop %v96
    %v127 = vmul.f32 %v126, 0.6931472
    %v128 = vlog2.pop %v97
    %v129 = vmul.f32 %v128, 0.6931472
    %v130 = vmul.f32 %v64, %v64
    %v131 = vmul.f32 %v65, %v65
    %v132 = vmul.f32 %v66, %v66
    %v133 = vmul.f32 %v67, %v67
    %v134 = vmul.f32 %v68, %v68
    %v135 = vmul.f32 %v69, %v69
    %v136 = vmul.f32 %v70, %v70
    %v137 = vmul.f32 %v71, %v71
    %v138 = vmul.f32 %v90, %v90
    %v139 = vmul.f32 %v91, %v91
    %v140 = vmul.f32 %v92, %v92
    %v141 = vmul.f32 %v93, %v93
    %v142 = vmul.f32 %v94, %v94
    %v143 = vmul.f32 %v95, %v95
    %v144 = vmul.f32 %v96, %v96
    %v145 = vmul.f32 %v97, %v97
    %v146 = vmul.f32 %v82, -0.25
    %v147 = vmul.f32 %v83, -0.25
    %v148 = vmul.f32 %v84, -0.25
    %v149 = vmul.f32 %v85, -0.25
    %v150 = vmul.f32 %v86, -0.25
    %v151 = vmul.f32 %v87, -0.25
    %v152 = vmul.f32 %v88, -0.25
    %v153 = vmul.f32 %v89, -0.25
    %v154 = vmul.f32 %v146, %v138
    %v155 = vmul.f32 %v147, %v139
    %v156 = vmul.f32 %v148, %v140
    %v157 = vmul.f32 %v149, %v141
    %v158 = vmul.f32 %v150, %v142
    %v159 = vmul.f32 %v151, %v143
    %v160 = vmul.f32 %v152, %v144
    %v161 = vmul.f32 %v153, %v145
    %v162 = vmul.f32 %v154, %v99
    %v163 = vmul.f32 %v155, %v101
    %v164 = vmul.f32 %v156, %v103
    %v165 = vmul.f32 %v157, %v105
    %v166 = vmul.f32 %v158, %v107
    %v167 = vmul.f32 %v159, %v109
    %v168 = vmul.f32 %v160, %v111
    %v169 = vmul.f32 %v161, %v113
    %v170 = vsub.f32 1.0, %v82
    %v171 = vsub.f32 1.0, %v83
    %v172 = vsub.f32 1.0, %v84
    %v173 = vsub.f32 1.0, %v85
    %v174 = vsub.f32 1.0, %v86
    %v175 = vsub.f32 1.0, %v87
    %v176 = vsub.f32 1.0, %v88
    %v177 = vsub.f32 1.0, %v89
    %v178 = vmul.f32 %v170, -0.75
    %v179 = vmul.f32 %v171, -0.75
    %v180 = vmul.f32 %v172, -0.75
    %v181 = vmul.f32 %v173, -0.75
    %v182 = vmul.f32 %v174, -0.75
    %v183 = vmul.f32 %v175, -0.75
    %v184 = vmul.f32 %v176, -0.75
    %v185 = vmul.f32 %v177, -0.75
    %v186 = vmul.f32 %v178, %v130
    %v187 = vmul.f32 %v179, %v131
    %v188 = vmul.f32 %v180, %v132
    %v189 = vmul.f32 %v181, %v133
    %v190 = vmul.f32 %v182, %v134
    %v191 = vmul.f32 %v183, %v135
    %v192 = vmul.f32 %v184, %v136
    %v193 = vmul.f32 %v185, %v137
    %v194 = vmul.f32 %v186, %v115
    %v195 = vmul.f32 %v187, %v117
    %v196 = vmul.f32 %v188, %v119
    %v197 = vmul.f32 %v189, %v121
    %v198 = vmul.f32 %v190, %v123
    %v199 = vmul.f32 %v191, %v125
    %v200 = vmul.f32 %v192, %v127
    %v201 = vmul.f32 %v193, %v129
    %v202 = vadd.f32 %v162, %v194
    %v203 = vadd.f32 %v163, %v195
    %v204 = vadd.f32 %v164, %v196
    %v205 = vadd.f32 %v165, %v197
    %v206 = vadd.f32 %v166, %v198
    %v207 = vadd.f32 %v167, %v199
    %v208 = vadd.f32 %v168, %v200
    %v209 = vadd.f32 %v169, %v201
    %v210 = vld [vmem:[#allocation7] sm:$0xff]
    %v211 = vld [vmem:[#allocation7 + $0x8] sm:$0xff]
    %v212 = vld [vmem:[#allocation7 + $0x10] sm:$0xff]
    %v213 = vld [vmem:[#allocation7 + $0x18] sm:$0xff]
    %v214 = vld [vmem:[#allocation7 + $0x20] sm:$0xff]
    %v215 = vld [vmem:[#allocation7 + $0x28] sm:$0xff]
    %v216 = vld [vmem:[#allocation7 + $0x30] sm:$0xff]
    %v217 = vld [vmem:[#allocation7 + $0x38] sm:$0xff]
    %v218 = vadd.f32 %v210, %v202
    %v219 = vadd.f32 %v211, %v203
    %v220 = vadd.f32 %v212, %v204
    %v221 = vadd.f32 %v213, %v205
    %v222 = vadd.f32 %v214, %v206
    %v223 = vadd.f32 %v215, %v207
    %v224 = vadd.f32 %v216, %v208
    %v225 = vadd.f32 %v217, %v209
    %226 = vst [vmem:[#allocation7] sm:$0xff] %v218
    %227 = vst [vmem:[#allocation7 + $0x8] sm:$0xff] %v219
    %228 = vst [vmem:[#allocation7 + $0x10] sm:$0xff] %v220
    %229 = vst [vmem:[#allocation7 + $0x18] sm:$0xff] %v221
    %230 = vst [vmem:[#allocation7 + $0x20] sm:$0xff] %v222
    %231 = vst [vmem:[#allocation7 + $0x28] sm:$0xff] %v223
    %232 = vst [vmem:[#allocation7 + $0x30] sm:$0xff] %v224
    %233 = vst [vmem:[#allocation7 + $0x38] sm:$0xff] %v225
    // Predicated region
    $region22: #{tpu_custom_call.1} parent=1 // pred_check
      _
    $region23: #{tpu_custom_call.1} parent=1 // pred_check_branch
      %235 = sbr.rel (0) target = $region25
    $region24: #{tpu_custom_call.1} parent=1 // pred_region
      %s237 = ssub.s32 1024, 1024
      %238 = vsyncadd [#allocation4], %s237
      %s239 = sshll.u32 [#allocation7], 4
      %s240 = int_to_ptr.vmem [resolvable:$true] %s239
      %245 = dma.vmem_to_hbm [thread:$0]  %s240, 1024, %s2, [#allocation4], 128, 128, 8
    $region25: #{tpu_custom_call.1} parent=1 // pred_fallthru
      _
    // Predicated region
    $region26: #{tpu_custom_call.1} parent=1 // pred_check
      _
    $region27: #{tpu_custom_call.1} parent=1 // pred_check_branch
      %247 = sbr.rel (0) target = $region29
    $region28: #{tpu_custom_call.1} parent=1 // pred_region
      %248 = dma.done [#allocation4], 1024
    $region29: #{tpu_custom_call.1} parent=1 // pred_fallthru
      _
    %249 = vsyncpa [#allocation3], 1
    %250 = vsyncpa [#allocation6], 1
    %251 = vsyncpa [#allocation4], 1

</llo_original>
